<compile_context>
chip_gen: v6e
topology: v6e:2x2x1
jax: 0.10.0
libtpu: 0.0.40
codegen_flags: <defaults>
</compile_context>

<pallas_src>
import functools

import jax
import jax.numpy as jnp
from jax.experimental import pallas as pl
from jax.experimental.pallas import tpu as pltpu

LANE = 128     # last-dim alignment for lane-dense MXU tiles / stores
SUBLANE = 8    # second-to-last-dim alignment (f32); bf16 packs 16


def _round_up(x, m):
    return ((x + m - 1) // m) * m


def _pad2d(a, rows, cols):
    """Zero-pad a 2-D array to (rows, cols)."""
    return jnp.pad(a, ((0, rows - a.shape[0]), (0, cols - a.shape[1])))


def dqn_forward_kernel(x_ref, w1_ref, b1_ref, w2_ref, b2_ref, w3_ref, b3_ref,
                       out_ref):
    # x arrives f32 from HBM; cast to the MXU input dtype (f32 or bf16) on the
    # VPU here instead of paying an extra HBM pass in the wrapper.
    x = x_ref[...].astype(w1_ref.dtype)
    # fc1 + ReLU  (MXU matmul, f32 accumulation; bias/ReLU on the VPU in f32)
    h1 = jnp.dot(x, w1_ref[...], preferred_element_type=jnp.float32)
    h1 = jnp.maximum(h1 + b1_ref[...], 0.0)
    # fc2 + ReLU
    h2 = jnp.dot(h1.astype(w2_ref.dtype), w2_ref[...],
                 preferred_element_type=jnp.float32)
    h2 = jnp.maximum(h2 + b2_ref[...], 0.0)
    # output layer (no activation)
    q = jnp.dot(h2.astype(w3_ref.dtype), w3_ref[...],
                preferred_element_type=jnp.float32)
    out_ref[...] = (q + b3_ref[...]).astype(out_ref.dtype)


def prepare_params(params, *, use_bf16=False):
    """One-time padding / casting of the weights (do this once, not per call).

    use_bf16: feed the MXU bf16 weights/activations (f32 accumulate).
              Recommended on all generations (v5e/v6e/v7x MXU is natively
              bf16 and it halves weight DMA bytes); keep False for bit-tight
              testing against the f32 reference.
    Returns (prepared_params, dims) where dims = (in_dim, fc1, fc2, n_actions)
    are the real (unpadded) layer sizes (pass as the static `dims` arg).
    """
    w1, b1, w2, b2, w3, b3 = (params["w1"], params["b1"], params["w2"],
                              params["b2"], params["w3"], params["b3"])
    in_dim, h1_dim = w1.shape
    h2_dim, n_actions = w2.shape[1], w3.shape[1]

    # Only the *output* feature dims are padded to 128 lanes (lane-dense MXU
    # tiles and full unmasked 128-lane stores).  w1's contracting dim stays at
    # the real in_dim because x is not feature-padded.
    h1_p = _round_up(h1_dim, LANE)
    h2_p = _round_up(h2_dim, LANE)
    out_p = _round_up(n_actions, LANE)

    mm_dtype = jnp.bfloat16 if use_bf16 else jnp.float32
    prepared = {
        "w1": _pad2d(w1, in_dim, h1_p).astype(mm_dtype),
        "b1": _pad2d(b1, 1, h1_p).astype(jnp.float32),
        "w2": _pad2d(w2, h1_p, h2_p).astype(mm_dtype),
        "b2": _pad2d(b2, 1, h2_p).astype(jnp.float32),
        "w3": _pad2d(w3, h2_p, out_p).astype(mm_dtype),
        "b3": _pad2d(b3, 1, out_p).astype(jnp.float32),
    }
    prepared = jax.tree_util.tree_map(jnp.asarray, prepared)
    return prepared, (in_dim, h1_dim, h2_dim, n_actions)


@functools.partial(jax.jit, static_argnames=("dims", "tm", "full_output"))
def dqn_forward(x, prepared, dims, *, tm=1024, full_output=False):
    """x: (batch, in_dim) float32.  prepared/dims: from prepare_params().

    tm:          batch tile (rounded to the sublane multiple).  1024 amortizes
                 the ~0.35 us per-grid-step overhead; per-step VMEM stays ~1-2
                 MiB double-buffered, far under every generation's limit.
    full_output: return the lane-dense (batch, 128) padded Q block (columns
                 >= n_actions are exactly 0) and skip the column slice, which
                 otherwise re-reads the whole output just to keep n_actions
                 columns.  Use when downstream argmaxes over [:n_actions].
    """
    in_dim, fc1_dim, fc2_dim, n_actions = dims
    w1, b1, w2, b2, w3, b3 = (prepared["w1"], prepared["b1"], prepared["w2"],
                              prepared["b2"], prepared["w3"], prepared["b3"])
    batch = x.shape[0]
    out_p = w3.shape[1]

    # bf16 packs two rows per sublane -> round batch tiling to 16 in that case.
    sublane = 16 if w1.dtype == jnp.bfloat16 else SUBLANE
    batch_p = _round_up(batch, sublane)

    tm_eff = min(_round_up(tm, sublane), batch_p)
    if batch_p > 256:
        # Ensure >= 2 grid steps so v7x's second TensorCore gets work
        # (dimension_semantics=("parallel",)); no-op on v5e/v6e (1 TC).
        tm_eff = min(tm_eff, _round_up(pl.cdiv(batch_p, 2), sublane))
    grid = (pl.cdiv(batch_p, tm_eff),)   # partial last tile is fine (row-wise
                                         # independent; OOB writes discarded)

    x_p = x if batch_p == batch else jnp.pad(x, ((0, batch_p - batch), (0, 0)))

    # x / out tiled along batch; weights & biases resident (constant index
    # map -> DMA'd once, VMEM-resident across all batch tiles).
    # NOTE: pipeline_mode=pl.Buffered(1) on the resident specs would save one
    # redundant buffer each (~negligible here), intentionally omitted.
    x_spec = pl.BlockSpec((tm_eff, in_dim), lambda i: (i, 0))
    out_spec = pl.BlockSpec((tm_eff, out_p), lambda i: (i, 0))
    resident = lambda a: pl.BlockSpec(a.shape, lambda i: (0, 0))

    # Advisory cost estimate with the *real* (unpadded) work / actual traffic.
    flops = 2 * batch * (in_dim * fc1_dim + fc1_dim * fc2_dim
                         + fc2_dim * n_actions)
    bytes_accessed = (x_p.size * x_p.dtype.itemsize
                      + sum(a.size * a.dtype.itemsize
                            for a in (w1, b1, w2, b2, w3, b3))
                      + batch_p * out_p * 4)

    out_padded = pl.pallas_call(
        dqn_forward_kernel,
        out_shape=jax.ShapeDtypeStruct((batch_p, out_p), jnp.float32),
        grid_spec=pltpu.PrefetchScalarGridSpec(
            num_scalar_prefetch=0,
            grid=grid,
            in_specs=[x_spec,
                      resident(w1), resident(b1),
                      resident(w2), resident(b2),
                      resident(w3), resident(b3)],
            out_specs=out_spec,
        ),
        compiler_params=pltpu.CompilerParams(
            # batch axis is embarrassingly parallel -> shard across v7x's 2 TCs.
            dimension_semantics=("parallel",),
        ),
        cost_estimate=pl.CostEstimate(flops=flops,
                                      transcendentals=0,
                                      bytes_accessed=bytes_accessed),
    )(x_p, w1, b1, w2, b2, w3, b3)

    if full_output:
        return out_padded[:batch]                 # (batch, 128) padded Q block
    return out_padded[:batch, :n_actions]


def init_params(key, input_dims, fc1, fc2, n_actions):
    """Deterministic init mimicking nn.Linear default (U[-1/sqrt(fan_in), +])."""
    def linear(key, fan_in, fan_out):
        kw, kb = jax.random.split(key)
        bound = 1.0 / jnp.sqrt(fan_in)
        w = jax.random.uniform(kw, (fan_in, fan_out), jnp.float32, -bound, bound)
        b = jax.random.uniform(kb, (1, fan_out), jnp.float32, -bound, bound)
        return w, b

    k1, k2, k3 = jax.random.split(key, 3)
    w1, b1 = linear(k1, input_dims, fc1)
    w2, b2 = linear(k2, fc1, fc2)
    w3, b3 = linear(k3, fc2, n_actions)
    return {"w1": w1, "b1": b1, "w2": w2, "b2": b2, "w3": w3, "b3": b3}


def dqn_ref(x, p):
    h1 = jnp.maximum(x @ p["w1"] + p["b1"], 0.0)
    h2 = jnp.maximum(h1 @ p["w2"] + p["b2"], 0.0)
    return h2 @ p["w3"] + p["b3"]


# TODO(synk): loss (MSELoss), Adam optimizer, and device plumbing from the
# PyTorch module are training machinery, not part of forward(); not ported.

if __name__ == "__main__":
    # Small shapes consistent with DeepQNetwork(lr, input_dims=(8,),
    # n_actions=4, fc1=32, fc2=32)
    batch, input_dims, fc1, fc2, n_actions = 2, 8, 32, 32, 4

    key = jax.random.PRNGKey(0)
    kx, kp = jax.random.split(key)
    x = jax.random.normal(kx, (batch, input_dims), jnp.float32)
    params = init_params(kp, input_dims, fc1, fc2, n_actions)
    ref = dqn_ref(x, params)

    # ---- f32 MXU path: bit-tight numerics ---------------------------------
    prepared_f32, dims = prepare_params(params, use_bf16=False)
    out = dqn_forward(x, prepared_f32, dims)
    jax.block_until_ready(out)
    assert out.shape == (batch, n_actions)
    assert jnp.allclose(out, ref, atol=1e-5, rtol=1e-5)

    # ---- bf16 MXU path (recommended on v5e/v6e/v7x): looser tolerance -----
    prepared_bf16, dims_bf16 = prepare_params(params, use_bf16=True)
    out_bf16 = dqn_forward(x, prepared_bf16, dims_bf16)
    jax.block_until_ready(out_bf16)
    assert jnp.allclose(out_bf16, ref, atol=5e-2, rtol=5e-2)

    # ---- multi-tile grid with an awkward batch (partial last tile) --------
    big_batch = 520
    xb = jax.random.normal(jax.random.PRNGKey(1), (big_batch, input_dims),
                           jnp.float32)
    refb = dqn_ref(xb, params)
    out_big = dqn_forward(xb, prepared_f32, dims, tm=256)
    jax.block_until_ready(out_big)
    assert out_big.shape == (big_batch, n_actions)
    assert jnp.allclose(out_big, refb, atol=1e-5, rtol=1e-5)

    # ---- lane-dense padded-Q output path (no column slice) ----------------
    out_full = dqn_forward(xb, prepared_f32, dims, full_output=True)
    jax.block_until_ready(out_full)
    assert out_full.shape == (big_batch, 128)
    assert jnp.allclose(out_full[:, :n_actions], refb, atol=1e-5, rtol=1e-5)

    print("KERNEL_OK")
</pallas_src>

<mosaic_0001>
module attributes {stable_mosaic.version = 11 : i64} {
  func.func @dqn_forward_kernel(%arg0: i32, %arg1: memref<8x8xf32, #tpu.memory_space<vmem>>, %arg2: memref<8x128xf32, #tpu.memory_space<vmem>>, %arg3: memref<1x128xf32, #tpu.memory_space<vmem>>, %arg4: memref<128x128xf32, #tpu.memory_space<vmem>>, %arg5: memref<1x128xf32, #tpu.memory_space<vmem>>, %arg6: memref<128x128xf32, #tpu.memory_space<vmem>>, %arg7: memref<1x128xf32, #tpu.memory_space<vmem>>, %arg8: memref<8x128xf32, #tpu.memory_space<vmem>>) attributes {dimension_semantics = [#tpu.dimension_semantics<parallel>], iteration_bounds = array<i64: 1>, scalar_prefetch = 0 : i64, scratch_operands = 0 : i64, tpu.core_type = #tpu.core_type<tc>, window_params = [{transform_indices = @transform_0, window_bounds = array<i64: 8, 8>}, {pipeline_mode = #tpu.pipeline_mode<synchronous>, transform_indices = @transform_1, window_bounds = array<i64: 8, 128>}, {pipeline_mode = #tpu.pipeline_mode<synchronous>, transform_indices = @transform_2, window_bounds = array<i64: 1, 128>}, {pipeline_mode = #tpu.pipeline_mode<synchronous>, transform_indices = @transform_3, window_bounds = array<i64: 128, 128>}, {pipeline_mode = #tpu.pipeline_mode<synchronous>, transform_indices = @transform_4, window_bounds = array<i64: 1, 128>}, {pipeline_mode = #tpu.pipeline_mode<synchronous>, transform_indices = @transform_5, window_bounds = array<i64: 128, 128>}, {pipeline_mode = #tpu.pipeline_mode<synchronous>, transform_indices = @transform_6, window_bounds = array<i64: 1, 128>}, {transform_indices = @transform_7, window_bounds = array<i64: 8, 128>}]} {
    %c0 = arith.constant 0 : index
    %c0_0 = arith.constant 0 : index
    %0 = vector.load %arg1[%c0, %c0_0] : memref<8x8xf32, #tpu.memory_space<vmem>>, vector<8x8xf32>
    %c0_1 = arith.constant 0 : index
    %c0_2 = arith.constant 0 : index
    %1 = vector.load %arg2[%c0_1, %c0_2] : memref<8x128xf32, #tpu.memory_space<vmem>>, vector<8x128xf32>
    %cst = arith.constant dense<0.000000e+00> : vector<8x128xf32>
    %2 = tpu.matmul %0, %1, %cst {dimension_numbers = #tpu.dot_dimension_numbers<[1], [0], [0], [1], [0, 0, 1, 1], [], []>} : vector<8x8xf32>, vector<8x128xf32>, vector<8x128xf32> -> vector<8x128xf32>
    %c0_3 = arith.constant 0 : index
    %c0_4 = arith.constant 0 : index
    %3 = vector.load %arg3[%c0_3, %c0_4] : memref<1x128xf32, #tpu.memory_space<vmem>>, vector<1x128xf32>
    %4 = vector.broadcast %3 : vector<1x128xf32> to vector<8x128xf32>
    %5 = arith.addf %2, %4 : vector<8x128xf32>
    %cst_5 = arith.constant 0.000000e+00 : f32
    %6 = vector.broadcast %cst_5 : f32 to vector<8x128xf32>
    %7 = arith.maximumf %5, %6 : vector<8x128xf32>
    %c0_6 = arith.constant 0 : index
    %c0_7 = arith.constant 0 : index
    %8 = vector.load %arg4[%c0_6, %c0_7] : memref<128x128xf32, #tpu.memory_space<vmem>>, vector<128x128xf32>
    %cst_8 = arith.constant dense<0.000000e+00> : vector<8x128xf32>
    %9 = tpu.matmul %7, %8, %cst_8 {dimension_numbers = #tpu.dot_dimension_numbers<[1], [0], [0], [1], [0, 0, 1, 1], [], []>} : vector<8x128xf32>, vector<128x128xf32>, vector<8x128xf32> -> vector<8x128xf32>
    %c0_9 = arith.constant 0 : index
    %c0_10 = arith.constant 0 : index
    %10 = vector.load %arg5[%c0_9, %c0_10] : memref<1x128xf32, #tpu.memory_space<vmem>>, vector<1x128xf32>
    %11 = vector.broadcast %10 : vector<1x128xf32> to vector<8x128xf32>
    %12 = arith.addf %9, %11 : vector<8x128xf32>
    %cst_11 = arith.constant 0.000000e+00 : f32
    %13 = vector.broadcast %cst_11 : f32 to vector<8x128xf32>
    %14 = arith.maximumf %12, %13 : vector<8x128xf32>
    %c0_12 = arith.constant 0 : index
    %c0_13 = arith.constant 0 : index
    %15 = vector.load %arg6[%c0_12, %c0_13] : memref<128x128xf32, #tpu.memory_space<vmem>>, vector<128x128xf32>
    %cst_14 = arith.constant dense<0.000000e+00> : vector<8x128xf32>
    %16 = tpu.matmul %14, %15, %cst_14 {dimension_numbers = #tpu.dot_dimension_numbers<[1], [0], [0], [1], [0, 0, 1, 1], [], []>} : vector<8x128xf32>, vector<128x128xf32>, vector<8x128xf32> -> vector<8x128xf32>
    %c0_15 = arith.constant 0 : index
    %c0_16 = arith.constant 0 : index
    %17 = vector.load %arg7[%c0_15, %c0_16] : memref<1x128xf32, #tpu.memory_space<vmem>>, vector<1x128xf32>
    %18 = vector.broadcast %17 : vector<1x128xf32> to vector<8x128xf32>
    %19 = arith.addf %16, %18 : vector<8x128xf32>
    %c0_17 = arith.constant 0 : index
    %c0_18 = arith.constant 0 : index
    %20 = vector.load %arg8[%c0_17, %c0_18] : memref<8x128xf32, #tpu.memory_space<vmem>>, vector<8x128xf32>
    tpu.vector_store %arg8[%c0_17, %c0_18], %19 {strides = array<i32>} : memref<8x128xf32, #tpu.memory_space<vmem>>, vector<8x128xf32>,
    return
  }
  func.func @transform_0(%arg0: i32) -> (i32, i32) {
    %c0_i32 = arith.constant 0 : i32
    %c0_i32_0 = arith.constant 0 : i32
    return %arg0, %c0_i32 : i32, i32
  }
  func.func @transform_1(%arg0: i32) -> (i32, i32) {
    %c0_i32 = arith.constant 0 : i32
    %c0_i32_0 = arith.constant 0 : i32
    %c0_i32_1 = arith.constant 0 : i32
    return %c0_i32, %c0_i32_0 : i32, i32
  }
  func.func @transform_2(%arg0: i32) -> (i32, i32) {
    %c0_i32 = arith.constant 0 : i32
    %c0_i32_0 = arith.constant 0 : i32
    %c0_i32_1 = arith.constant 0 : i32
    return %c0_i32, %c0_i32_0 : i32, i32
  }
  func.func @transform_3(%arg0: i32) -> (i32, i32) {
    %c0_i32 = arith.constant 0 : i32
    %c0_i32_0 = arith.constant 0 : i32
    %c0_i32_1 = arith.constant 0 : i32
    return %c0_i32, %c0_i32_0 : i32, i32
  }
  func.func @transform_4(%arg0: i32) -> (i32, i32) {
    %c0_i32 = arith.constant 0 : i32
    %c0_i32_0 = arith.constant 0 : i32
    %c0_i32_1 = arith.constant 0 : i32
    return %c0_i32, %c0_i32_0 : i32, i32
  }
  func.func @transform_5(%arg0: i32) -> (i32, i32) {
    %c0_i32 = arith.constant 0 : i32
    %c0_i32_0 = arith.constant 0 : i32
    %c0_i32_1 = arith.constant 0 : i32
    return %c0_i32, %c0_i32_0 : i32, i32
  }
  func.func @transform_6(%arg0: i32) -> (i32, i32) {
    %c0_i32 = arith.constant 0 : i32
    %c0_i32_0 = arith.constant 0 : i32
    %c0_i32_1 = arith.constant 0 : i32
    return %c0_i32, %c0_i32_0 : i32, i32
  }
  func.func @transform_7(%arg0: i32) -> (i32, i32) {
    %c0_i32 = arith.constant 0 : i32
    %c0_i32_0 = arith.constant 0 : i32
    return %arg0, %c0_i32 : i32, i32
  }
}

</mosaic_0001>

<llo_original>
// kernel: dqn_forward.1
$region0: #{dqn_forward.1}
  #allocation0 [shape = 'u32[]', space=smem, size = 0x4, offset = 0x4, fixed_abs, tag = 'smem constant byte address 0x4 - core index']
  #allocation1 [shape = 'u32[144,128]{1,0:T(1,128)}', space=vmem, size = 0x12000, scoped, tag = 'internal scratch']
  %s0 = inlined_call_operand.vmem [shape: f32[8,8], index: 0, kind: input, shape index: {}]
  %s1 = inlined_call_operand.vmem [shape: f32[8,128], index: 1, kind: input, shape index: {}]
  %s2 = inlined_call_operand.vmem [shape: f32[1,128], index: 2, kind: input, shape index: {}]
  %s3 = inlined_call_operand.hbm [shape: f32[128,128], index: 3, kind: input, shape index: {}]
  %s4 = inlined_call_operand.vmem [shape: f32[1,128], index: 4, kind: input, shape index: {}]
  %s5 = inlined_call_operand.hbm [shape: f32[128,128], index: 5, kind: input, shape index: {}]
  %s6 = inlined_call_operand.vmem [shape: f32[1,128], index: 6, kind: input, shape index: {}]
  %s7 = inlined_call_operand.vmem [shape: f32[8,128], index: 7, kind: output, shape index: {}]
  %s8 = sld [smem:[#allocation0]]
  $region46: #{dqn_forward.1} parent=0
    _
  %s10 = ssub.s32 1, %s8
  %s11 = scalar_select 0, %s10, %s8
  $region1: #{dqn_forward.1} parent=0
    #allocation2 [shape = 'u8[65536]{0}', space=vmem, size = 0x10000, scoped, tag = 'input window, operand 3, single buffered']
    #allocation3 [shape = 's32[1]{0}', space=sflag, size = 0x4, scoped, tag = 'scoped memory for dqn_forward.1']
    #allocation4 [shape = 'u8[65536]{0}', space=vmem, size = 0x10000, scoped, tag = 'input window, operand 5, single buffered']
    #allocation5 [shape = 's32[1]{0}', space=sflag, size = 0x4, scoped, tag = 'scoped memory for dqn_forward.1']
    %12 = vsyncpa [#allocation3], 0
    %13 = vsyncpa [#allocation5], 0
    // Predicated region
    $region2: #{dqn_forward.1} parent=1 // pred_check
      _
    $region3: #{dqn_forward.1} parent=1 // pred_check_branch
      %15 = sbr.rel (0) target = $region5
    $region4: #{dqn_forward.1} parent=1 // pred_region
      _
    $region5: #{dqn_forward.1} parent=1 // pred_fallthru
      _
    // Predicated region
    $region6: #{dqn_forward.1} parent=1 // pred_check
      _
    $region7: #{dqn_forward.1} parent=1 // pred_check_branch
      %17 = sbr.rel (0) target = $region9
    $region8: #{dqn_forward.1} parent=1 // pred_region
      _
    $region9: #{dqn_forward.1} parent=1 // pred_fallthru
      _
    // Predicated region
    $region10: #{dqn_forward.1} parent=1 // pred_check
      _
    $region11: #{dqn_forward.1} parent=1 // pred_check_branch
      %19 = sbr.rel (0) target = $region13
    $region12: #{dqn_forward.1} parent=1 // pred_region
      _
    $region13: #{dqn_forward.1} parent=1 // pred_fallthru
      _
    // Predicated region
    $region14: #{dqn_forward.1} parent=1 // pred_check
      _
    $region15: #{dqn_forward.1} parent=1 // pred_check_branch
      %21 = sbr.rel (0) target = $region17
    $region16: #{dqn_forward.1} parent=1 // pred_region
      %s23 = ssub.s32 2048, 2048
      %24 = vsyncadd [#allocation3], %s23
      %s25 = sshll.u32 [#allocation2], 4
      %s26 = int_to_ptr.vmem [resolvable:$true] %s25
      %31 = dma.hbm_to_vmem [thread:$0]  %s3, 2048, %s26, [#allocation3], 128, 128, 8
    $region17: #{dqn_forward.1} parent=1 // pred_fallthru
      _
    // Predicated region
    $region18: #{dqn_forward.1} parent=1 // pred_check
      _
    $region19: #{dqn_forward.1} parent=1 // pred_check_branch
      %33 = sbr.rel (0) target = $region21
    $region20: #{dqn_forward.1} parent=1 // pred_region
      _
    $region21: #{dqn_forward.1} parent=1 // pred_fallthru
      _
    // Predicated region
    $region22: #{dqn_forward.1} parent=1 // pred_check
      _
    $region23: #{dqn_forward.1} parent=1 // pred_check_branch
      %35 = sbr.rel (0) target = $region25
    $region24: #{dqn_forward.1} parent=1 // pred_region
      %s37 = ssub.s32 2048, 2048
      %38 = vsyncadd [#allocation5], %s37
      %s39 = sshll.u32 [#allocation4], 4
      %s40 = int_to_ptr.vmem [resolvable:$true] %s39
      %45 = dma.hbm_to_vmem [thread:$0]  %s5, 2048, %s40, [#allocation5], 128, 128, 8
    $region25: #{dqn_forward.1} parent=1 // pred_fallthru
      _
    // Predicated region
    $region26: #{dqn_forward.1} parent=1 // pred_check
      _
    $region27: #{dqn_forward.1} parent=1 // pred_check_branch
      %47 = sbr.rel (0) target = $region29
    $region28: #{dqn_forward.1} parent=1 // pred_region
      _
    $region29: #{dqn_forward.1} parent=1 // pred_fallthru
      _
    // Predicated region
    $region30: #{dqn_forward.1} parent=1 // pred_check
      _
    $region31: #{dqn_forward.1} parent=1 // pred_check_branch
      %49 = sbr.rel (0) target = $region33
    $region32: #{dqn_forward.1} parent=1 // pred_region
      %50 = dma.done [#allocation3], 2048
    $region33: #{dqn_forward.1} parent=1 // pred_fallthru
      _
    // Predicated region
    $region34: #{dqn_forward.1} parent=1 // pred_check
      _
    $region35: #{dqn_forward.1} parent=1 // pred_check_branch
      %52 = sbr.rel (0) target = $region37
    $region36: #{dqn_forward.1} parent=1 // pred_region
      %53 = dma.done [#allocation5], 2048
    $region37: #{dqn_forward.1} parent=1 // pred_fallthru
      _
    %v54 = vld [vmem:[%s0] sm:$0xff]
    %v55 = vld [vmem:[%s1] sm:$0xff]
    %v56 = vld [vmem:[%s2] sm:$0x1]
    %v58 = vlaneseq
    %v59 = vshrl.u32 %v58, 7
    %v60 = vsub.s32 0, %v59
    %v61 = vrot.slane %v56, %v60
    %vm63 = vcmask 64512
    %v65 = vsel %vm63, %v54, 0
    %67 = vmatprep.subr.mxu0 0.0
    %68 = vmatpush1.msra.mxu0 0.0
    %69 = vmatprep.subr.mxu0 0.0
    %70 = vmatpush1.msra.mxu0 0.0
    %71 = vmatprep.subr.mxu0 0.0
    %72 = vmatpush1.msra.mxu0 0.0
    %73 = vmatprep.subr.mxu0 0.0
    %74 = vmatpush1.msra.mxu0 0.0
    %75 = vmatprep.subr.mxu0 0.0
    %76 = vmatpush1.msra.mxu0 0.0
    %77 = vmatprep.subr.mxu0 0.0
    %78 = vmatpush1.msra.mxu0 0.0
    %79 = vmatprep.subr.mxu0 0.0
    %80 = vmatpush1.msra.mxu0 0.0
    %81 = vmatprep.subr.mxu0 0.0
    %82 = vmatpush1.msra.mxu0 0.0
    %83 = vmatprep.subr.mxu0 0.0
    %84 = vmatpush1.msra.mxu0 0.0
    %85 = vmatprep.subr.mxu0 0.0
    %86 = vmatpush1.msra.mxu0 0.0
    %87 = vmatprep.subr.mxu0 0.0
    %88 = vmatpush1.msra.mxu0 0.0
    %89 = vmatprep.subr.mxu0 0.0
    %90 = vmatpush1.msra.mxu0 0.0
    %91 = vmatprep.subr.mxu0 0.0
    %92 = vmatpush1.msra.mxu0 0.0
    %93 = vmatprep.subr.mxu0 0.0
    %94 = vmatpush1.msra.mxu0 0.0
    %95 = vmatprep.subr.mxu0 0.0
    %96 = vmatpush1.msra.mxu0 0.0
    %97 = vmatprep.subr.mxu0 0.0
    %98 = vmatpush1.msra.mxu0 %v55
    %99 = vmatprep.subr.mxu0 0.0
    %100 = vmatpush2.msra.mxu0 0.0
    %101 = vmatprep.subr.mxu0 0.0
    %102 = vmatpush2.msra.mxu0 0.0
    %103 = vmatprep.subr.mxu0 0.0
    %104 = vmatpush2.msra.mxu0 0.0
    %105 = vmatprep.subr.mxu0 0.0
    %106 = vmatpush2.msra.mxu0 0.0
    %107 = vmatprep.subr.mxu0 0.0
    %108 = vmatpush2.msra.mxu0 0.0
    %109 = vmatprep.subr.mxu0 0.0
    %110 = vmatpush2.msra.mxu0 0.0
    %111 = vmatprep.subr.mxu0 0.0
    %112 = vmatpush2.msra.mxu0 0.0
    %113 = vmatprep.subr.mxu0 0.0
    %114 = vmatpush2.msra.mxu0 0.0
    %115 = vmatprep.subr.mxu0 0.0
    %116 = vmatpush2.msra.mxu0 0.0
    %117 = vmatprep.subr.mxu0 0.0
    %118 = vmatpush2.msra.mxu0 0.0
    %119 = vmatprep.subr.mxu0 0.0
    %120 = vmatpush2.msra.mxu0 0.0
    %121 = vmatprep.subr.mxu0 0.0
    %122 = vmatpush2.msra.mxu0 0.0
    %123 = vmatprep.subr.mxu0 0.0
    %124 = vmatpush2.msra.mxu0 0.0
    %125 = vmatprep.subr.mxu0 0.0
    %126 = vmatpush2.msra.mxu0 0.0
    %127 = vmatprep.subr.mxu0 0.0
    %128 = vmatpush2.msra.mxu0 0.0
    %129 = vmatprep.subr.mxu0 0.0
    %130 = vmatpush2.msra.mxu0 0.0
    %131 = vmatprep.mubr.f32.mxu0 0.0
    %132 = vmatmul.mubr.f32.gmra.mxu0 %v65
    %v133 = vpop.f32.mrf.mxu0
    %v134 = vadd.f32 %v61, %v133
    %v135 = vpop.f32.mrf.mxu0
    %136 = vdwg.mxu0
    %v137 = vmax.f32 %v134, 0.0
    %v138 = vld [vmem:[#allocation2] sm:$0xff]
    %v139 = vld [vmem:[#allocation2 + $0x8] sm:$0xff]
    %v140 = vld [vmem:[#allocation2 + $0x10] sm:$0xff]
    %v141 = vld [vmem:[#allocation2 + $0x18] sm:$0xff]
    %v142 = vld [vmem:[#allocation2 + $0x20] sm:$0xff]
    %v143 = vld [vmem:[#allocation2 + $0x28] sm:$0xff]
    %v144 = vld [vmem:[#allocation2 + $0x30] sm:$0xff]
    %v145 = vld [vmem:[#allocation2 + $0x38] sm:$0xff]
    %v146 = vld [vmem:[#allocation2 + $0x40] sm:$0xff]
    %v147 = vld [vmem:[#allocation2 + $0x48] sm:$0xff]
    %v148 = vld [vmem:[#allocation2 + $0x50] sm:$0xff]
    %v149 = vld [vmem:[#allocation2 + $0x58] sm:$0xff]
    %v150 = vld [vmem:[#allocation2 + $0x60] sm:$0xff]
    %v151 = vld [vmem:[#allocation2 + $0x68] sm:$0xff]
    %v152 = vld [vmem:[#allocation2 + $0x70] sm:$0xff]
    %v153 = vld [vmem:[#allocation2 + $0x78] sm:$0xff]
    %v154 = vld [vmem:[%s4] sm:$0x1]
    %v156 = vlaneseq
    %v157 = vshrl.u32 %v156, 7
    %v158 = vsub.s32 0, %v157
    %v159 = vrot.slane %v154, %v158
    %161 = vmatprep.subr.mxu0 0.0
    %162 = vmatpush1.msra.mxu0 %v153
    %163 = vmatprep.subr.mxu0 0.0
    %164 = vmatpush1.msra.mxu0 %v152
    %165 = vmatprep.subr.mxu0 0.0
    %166 = vmatpush1.msra.mxu0 %v151
    %167 = vmatprep.subr.mxu0 0.0
    %168 = vmatpush1.msra.mxu0 %v150
    %169 = vmatprep.subr.mxu0 0.0
    %170 = vmatpush1.msra.mxu0 %v149
    %171 = vmatprep.subr.mxu0 0.0
    %172 = vmatpush1.msra.mxu0 %v148
    %173 = vmatprep.subr.mxu0 0.0
    %174 = vmatpush1.msra.mxu0 %v147
    %175 = vmatprep.subr.mxu0 0.0
    %176 = vmatpush1.msra.mxu0 %v146
    %177 = vmatprep.subr.mxu0 0.0
    %178 = vmatpush1.msra.mxu0 %v145
    %179 = vmatprep.subr.mxu0 0.0
    %180 = vmatpush1.msra.mxu0 %v144
    %181 = vmatprep.subr.mxu0 0.0
    %182 = vmatpush1.msra.mxu0 %v143
    %183 = vmatprep.subr.mxu0 0.0
    %184 = vmatpush1.msra.mxu0 %v142
    %185 = vmatprep.subr.mxu0 0.0
    %186 = vmatpush1.msra.mxu0 %v141
    %187 = vmatprep.subr.mxu0 0.0
    %188 = vmatpush1.msra.mxu0 %v140
    %189 = vmatprep.subr.mxu0 0.0
    %190 = vmatpush1.msra.mxu0 %v139
    %191 = vmatprep.subr.mxu0 0.0
    %192 = vmatpush1.msra.mxu0 %v138
    %193 = vmatprep.subr.mxu0 0.0
    %194 = vmatpush2.msra.mxu0 0.0
    %195 = vmatprep.subr.mxu0 0.0
    %196 = vmatpush2.msra.mxu0 0.0
    %197 = vmatprep.subr.mxu0 0.0
    %198 = vmatpush2.msra.mxu0 0.0
    %199 = vmatprep.subr.mxu0 0.0
    %200 = vmatpush2.msra.mxu0 0.0
    %201 = vmatprep.subr.mxu0 0.0
    %202 = vmatpush2.msra.mxu0 0.0
    %203 = vmatprep.subr.mxu0 0.0
    %204 = vmatpush2.msra.mxu0 0.0
    %205 = vmatprep.subr.mxu0 0.0
    %206 = vmatpush2.msra.mxu0 0.0
    %207 = vmatprep.subr.mxu0 0.0
    %208 = vmatpush2.msra.mxu0 0.0
    %209 = vmatprep.subr.mxu0 0.0
    %210 = vmatpush2.msra.mxu0 0.0
    %211 = vmatprep.subr.mxu0 0.0
    %212 = vmatpush2.msra.mxu0 0.0
    %213 = vmatprep.subr.mxu0 0.0
    %214 = vmatpush2.msra.mxu0 0.0
    %215 = vmatprep.subr.mxu0 0.0
    %216 = vmatpush2.msra.mxu0 0.0
    %217 = vmatprep.subr.mxu0 0.0
    %218 = vmatpush2.msra.mxu0 0.0
    %219 = vmatprep.subr.mxu0 0.0
    %220 = vmatpush2.msra.mxu0 0.0
    %221 = vmatprep.subr.mxu0 0.0
    %222 = vmatpush2.msra.mxu0 0.0
    %223 = vmatprep.subr.mxu0 0.0
    %224 = vmatpush2.msra.mxu0 0.0
    %225 = vmatprep.mubr.f32.mxu0 0.0
    %226 = vmatmul.mubr.f32.gmra.mxu0 %v137
    %v227 = vpop.f32.mrf.mxu0
    %v228 = vadd.f32 %v159, %v227
    %v229 = vpop.f32.mrf.mxu0
    %230 = vdwg.mxu0
    %v231 = vmax.f32 %v228, 0.0
    %v232 = vld [vmem:[#allocation4] sm:$0xff]
    %v233 = vld [vmem:[#allocation4 + $0x8] sm:$0xff]
    %v234 = vld [vmem:[#allocation4 + $0x10] sm:$0xff]
    %v235 = vld [vmem:[#allocation4 + $0x18] sm:$0xff]
    %v236 = vld [vmem:[#allocation4 + $0x20] sm:$0xff]
    %v237 = vld [vmem:[#allocation4 + $0x28] sm:$0xff]
    %v238 = vld [vmem:[#allocation4 + $0x30] sm:$0xff]
    %v239 = vld [vmem:[#allocation4 + $0x38] sm:$0xff]
    %v240 = vld [vmem:[#allocation4 + $0x40] sm:$0xff]
    %v241 = vld [vmem:[#allocation4 + $0x48] sm:$0xff]
    %v242 = vld [vmem:[#allocation4 + $0x50] sm:$0xff]
    %v243 = vld [vmem:[#allocation4 + $0x58] sm:$0xff]
    %v244 = vld [vmem:[#allocation4 + $0x60] sm:$0xff]
    %v245 = vld [vmem:[#allocation4 + $0x68] sm:$0xff]
    %v246 = vld [vmem:[#allocation4 + $0x70] sm:$0xff]
    %v247 = vld [vmem:[#allocation4 + $0x78] sm:$0xff]
    %v248 = vld [vmem:[%s6] sm:$0x1]
    %v250 = vlaneseq
    %v251 = vshrl.u32 %v250, 7
    %v252 = vsub.s32 0, %v251
    %v253 = vrot.slane %v248, %v252
    %255 = vmatprep.subr.mxu0 0.0
    %256 = vmatpush1.msra.mxu0 %v247
    %257 = vmatprep.subr.mxu0 0.0
    %258 = vmatpush1.msra.mxu0 %v246
    %259 = vmatprep.subr.mxu0 0.0
    %260 = vmatpush1.msra.mxu0 %v245
    %261 = vmatprep.subr.mxu0 0.0
    %262 = vmatpush1.msra.mxu0 %v244
    %263 = vmatprep.subr.mxu0 0.0
    %264 = vmatpush1.msra.mxu0 %v243
    %265 = vmatprep.subr.mxu0 0.0
    %266 = vmatpush1.msra.mxu0 %v242
    %267 = vmatprep.subr.mxu0 0.0
    %268 = vmatpush1.msra.mxu0 %v241
    %269 = vmatprep.subr.mxu0 0.0
    %270 = vmatpush1.msra.mxu0 %v240
    %271 = vmatprep.subr.mxu0 0.0
    %272 = vmatpush1.msra.mxu0 %v239
    %273 = vmatprep.subr.mxu0 0.0
    %274 = vmatpush1.msra.mxu0 %v238
    %275 = vmatprep.subr.mxu0 0.0
    %276 = vmatpush1.msra.mxu0 %v237
    %277 = vmatprep.subr.mxu0 0.0
    %278 = vmatpush1.msra.mxu0 %v236
    %279 = vmatprep.subr.mxu0 0.0
    %280 = vmatpush1.msra.mxu0 %v235
    %281 = vmatprep.subr.mxu0 0.0
    %282 = vmatpush1.msra.mxu0 %v234
    %283 = vmatprep.subr.mxu0 0.0
    %284 = vmatpush1.msra.mxu0 %v233
    %285 = vmatprep.subr.mxu0 0.0
    %286 = vmatpush1.msra.mxu0 %v232
    %287 = vmatprep.subr.mxu0 0.0
    %288 = vmatpush2.msra.mxu0 0.0
    %289 = vmatprep.subr.mxu0 0.0
    %290 = vmatpush2.msra.mxu0 0.0
    %291 = vmatprep.subr.mxu0 0.0
    %292 = vmatpush2.msra.mxu0 0.0
    %293 = vmatprep.subr.mxu0 0.0
    %294 = vmatpush2.msra.mxu0 0.0
    %295 = vmatprep.subr.mxu0 0.0
    %296 = vmatpush2.msra.mxu0 0.0
    %297 = vmatprep.subr.mxu0 0.0
    %298 = vmatpush2.msra.mxu0 0.0
    %299 = vmatprep.subr.mxu0 0.0
    %300 = vmatpush2.msra.mxu0 0.0
    %301 = vmatprep.subr.mxu0 0.0
    %302 = vmatpush2.msra.mxu0 0.0
    %303 = vmatprep.subr.mxu0 0.0
    %304 = vmatpush2.msra.mxu0 0.0
    %305 = vmatprep.subr.mxu0 0.0
    %306 = vmatpush2.msra.mxu0 0.0
    %307 = vmatprep.subr.mxu0 0.0
    %308 = vmatpush2.msra.mxu0 0.0
    %309 = vmatprep.subr.mxu0 0.0
    %310 = vmatpush2.msra.mxu0 0.0
    %311 = vmatprep.subr.mxu0 0.0
    %312 = vmatpush2.msra.mxu0 0.0
    %313 = vmatprep.subr.mxu0 0.0
    %314 = vmatpush2.msra.mxu0 0.0
    %315 = vmatprep.subr.mxu0 0.0
    %316 = vmatpush2.msra.mxu0 0.0
    %317 = vmatprep.subr.mxu0 0.0
    %318 = vmatpush2.msra.mxu0 0.0
    %319 = vmatprep.mubr.f32.mxu0 0.0
    %320 = vmatmul.mubr.f32.gmra.mxu0 %v231
    %v321 = vpop.f32.mrf.mxu0
    %v322 = vadd.f32 %v253, %v321
    %v323 = vpop.f32.mrf.mxu0
    %324 = vdwg.mxu0
    %325 = vst [vmem:[%s7] sm:$0xff] %v322
    // Predicated region
    $region38: #{dqn_forward.1} parent=1 // pred_check
      _
    $region39: #{dqn_forward.1} parent=1 // pred_check_branch
      %327 = sbr.rel (0) target = $region41
    $region40: #{dqn_forward.1} parent=1 // pred_region
      _
    $region41: #{dqn_forward.1} parent=1 // pred_fallthru
      _
    // Predicated region
    $region42: #{dqn_forward.1} parent=1 // pred_check
      _
    $region43: #{dqn_forward.1} parent=1 // pred_check_branch
      %329 = sbr.rel (0) target = $region45
    $region44: #{dqn_forward.1} parent=1 // pred_region
      _
    $region45: #{dqn_forward.1} parent=1 // pred_fallthru
      _
    %330 = vsyncpa [#allocation3], 1
    %331 = vsyncpa [#allocation5], 1

</llo_original>
